<compile_context>
chip_gen: v7x
topology: tpu7x:2x2x1
jax: 0.10.0
libtpu: 0.0.40
codegen_flags: <defaults>
</compile_context>

<pallas_src>
import jax
import jax.numpy as jnp
from jax.experimental import pallas as pl
from jax.experimental.pallas import tpu as pltpu


def mlp_kernel(x_ref, w1_ref, b1_ref, w2_ref, b2_ref, o_ref):
    # Layer 1: relu(x @ W1 + b1). Feed the MXU in bf16 (cast in-kernel, hidden
    # under DMA/MXU slack), accumulate in f32, bias + ReLU epilogue in f32.
    x_bf = x_ref[...].astype(jnp.bfloat16)
    w1_bf = w1_ref[...].astype(jnp.bfloat16)
    h = jnp.dot(x_bf, w1_bf, preferred_element_type=jnp.float32)
    h = jnp.maximum(h + b1_ref[...], 0.0)            # (tile_n, 256) f32

    # Layer 2: h @ W2 + b2 -> narrow (tile_n, 10) f32 output (masked stores,
    # but the HBM write DMA is 12.8x smaller than a 128-lane padded output).
    y = jnp.dot(h.astype(jnp.bfloat16), w2_ref[...].astype(jnp.bfloat16),
                preferred_element_type=jnp.float32)
    o_ref[...] = (y + b2_ref[...]).astype(o_ref.dtype)


def _round_up(v, m):
    return ((v + m - 1) // m) * m


def mlp_forward(x, w1, b1, w2, b2, tile_n=2048):
    """x: (N, in_dim) f32; w1: (in_dim, H); b1: (1, H); w2: (H, out); b2: (1, out)."""
    n, in_dim = x.shape
    hidden = w1.shape[1]
    out_dim = w2.shape[1]

    # Batch tiling: multiples of 8 sublanes. Cap the tile at ceil(N/2) rounded
    # up to 8 so big batches always yield >=2 grid steps (second TC on v7x).
    # Non-divisible N is handled by Pallas boundary clipping (output rows past
    # N are dropped), so there is no wrapper-side pad or slice.
    if n <= 8:
        tile_n = n
    else:
        half8 = _round_up(-(-n // 2), 8)
        tile_n = max(8, min(tile_n, half8))
    grid_n = pl.cdiv(n, tile_n)

    # Advisory cost hint (real math / real bytes, not padded).
    flops = 2 * n * (in_dim * hidden + hidden * out_dim)
    bytes_accessed = 4 * (x.size + w1.size + b1.size + w2.size + b2.size
                          + n * out_dim)

    out = pl.pallas_call(
        mlp_kernel,
        out_shape=jax.ShapeDtypeStruct((n, out_dim), x.dtype),
        grid_spec=pl.GridSpec(
            grid=(grid_n,),
            in_specs=[
                # x: streamed per batch tile (double-buffered by the pipeline).
                pl.BlockSpec((tile_n, in_dim), lambda i: (i, 0)),
                # weights / biases: constant block index -> VMEM-resident.
                pl.BlockSpec((in_dim, hidden), lambda i: (0, 0)),
                pl.BlockSpec((1, hidden), lambda i: (0, 0)),
                pl.BlockSpec((hidden, out_dim), lambda i: (0, 0)),
                pl.BlockSpec((1, out_dim), lambda i: (0, 0)),
            ],
            out_specs=pl.BlockSpec((tile_n, out_dim), lambda i: (i, 0)),
        ),
        compiler_params=pltpu.CompilerParams(
            dimension_semantics=("parallel",)),      # shards across TCs on v7x
        cost_estimate=pl.CostEstimate(
            flops=flops, transcendentals=0, bytes_accessed=bytes_accessed),
    )(x, w1, b1, w2, b2)

    return out


def init_params(key, in_dim=20, hidden_dim=256, out_dim=10, dtype=jnp.float32):
    # Deterministic init matching PyTorch nn.Linear default:
    # U(-1/sqrt(fan_in), 1/sqrt(fan_in)) for both weight and bias.
    k1, k2, k3, k4 = jax.random.split(key, 4)
    bound1 = 1.0 / jnp.sqrt(in_dim)
    bound2 = 1.0 / jnp.sqrt(hidden_dim)
    # Weights stored as (in, out) == W.T relative to PyTorch's (out, in).
    w1 = jax.random.uniform(k1, (in_dim, hidden_dim), dtype, -bound1, bound1)
    b1 = jax.random.uniform(k2, (1, hidden_dim), dtype, -bound1, bound1)
    w2 = jax.random.uniform(k3, (hidden_dim, out_dim), dtype, -bound2, bound2)
    b2 = jax.random.uniform(k4, (1, out_dim), dtype, -bound2, bound2)
    return w1, b1, w2, b2


if __name__ == "__main__":
    key = jax.random.PRNGKey(0)
    kx, kp = jax.random.split(key)

    batch = 8
    x = jax.random.normal(kx, (batch, 20), jnp.float32)
    w1, b1, w2, b2 = init_params(kp)

    out = mlp_forward(x, w1, b1, w2, b2)
    out = jax.block_until_ready(out)

    # Reference in plain JAX mirroring the kernel's bf16-feed / f32-accum math.
    def bf(a):
        return a.astype(jnp.bfloat16)
    h_ref = jnp.maximum(
        jnp.dot(bf(x), bf(w1), preferred_element_type=jnp.float32) + b1, 0.0)
    ref = jnp.dot(bf(h_ref), bf(w2), preferred_element_type=jnp.float32) + b2

    assert out.shape == (batch, 10)
    assert jnp.allclose(out, ref, atol=2e-2, rtol=2e-2)

    print("KERNEL_OK")
</pallas_src>

<mosaic_0001>
module attributes {stable_mosaic.version = 11 : i64} {
  func.func @mlp_kernel(%arg0: i32, %arg1: memref<8x20xf32, #tpu.memory_space<vmem>>, %arg2: memref<20x256xf32, #tpu.memory_space<vmem>>, %arg3: memref<1x256xf32, #tpu.memory_space<vmem>>, %arg4: memref<256x10xf32, #tpu.memory_space<vmem>>, %arg5: memref<1x10xf32, #tpu.memory_space<vmem>>, %arg6: memref<8x10xf32, #tpu.memory_space<vmem>>) attributes {dimension_semantics = [#tpu.dimension_semantics<parallel>], iteration_bounds = array<i64: 1>, scalar_prefetch = 0 : i64, scratch_operands = 0 : i64, tpu.core_type = #tpu.core_type<tc>, window_params = [{transform_indices = @transform_0, window_bounds = array<i64: 8, 20>}, {pipeline_mode = #tpu.pipeline_mode<synchronous>, transform_indices = @transform_1, window_bounds = array<i64: 20, 256>}, {pipeline_mode = #tpu.pipeline_mode<synchronous>, transform_indices = @transform_2, window_bounds = array<i64: 1, 256>}, {pipeline_mode = #tpu.pipeline_mode<synchronous>, transform_indices = @transform_3, window_bounds = array<i64: 256, 10>}, {pipeline_mode = #tpu.pipeline_mode<synchronous>, transform_indices = @transform_4, window_bounds = array<i64: 1, 10>}, {transform_indices = @transform_5, window_bounds = array<i64: 8, 10>}]} {
    %c0 = arith.constant 0 : index
    %c0_0 = arith.constant 0 : index
    %0 = vector.load %arg1[%c0, %c0_0] : memref<8x20xf32, #tpu.memory_space<vmem>>, vector<8x20xf32>
    %1 = arith.truncf %0 : vector<8x20xf32> to vector<8x20xbf16>
    %c0_1 = arith.constant 0 : index
    %c0_2 = arith.constant 0 : index
    %2 = vector.load %arg2[%c0_1, %c0_2] : memref<20x256xf32, #tpu.memory_space<vmem>>, vector<20x256xf32>
    %3 = arith.truncf %2 : vector<20x256xf32> to vector<20x256xbf16>
    %cst = arith.constant dense<0.000000e+00> : vector<8x256xf32>
    %4 = tpu.matmul %1, %3, %cst {dimension_numbers = #tpu.dot_dimension_numbers<[1], [0], [0], [1], [0, 0, 1, 1], [], []>} : vector<8x20xbf16>, vector<20x256xbf16>, vector<8x256xf32> -> vector<8x256xf32>
    %c0_3 = arith.constant 0 : index
    %c0_4 = arith.constant 0 : index
    %5 = vector.load %arg3[%c0_3, %c0_4] : memref<1x256xf32, #tpu.memory_space<vmem>>, vector<1x256xf32>
    %6 = vector.broadcast %5 : vector<1x256xf32> to vector<8x256xf32>
    %7 = arith.addf %4, %6 : vector<8x256xf32>
    %cst_5 = arith.constant 0.000000e+00 : f32
    %8 = vector.broadcast %cst_5 : f32 to vector<8x256xf32>
    %9 = arith.maximumf %7, %8 : vector<8x256xf32>
    %10 = arith.truncf %9 : vector<8x256xf32> to vector<8x256xbf16>
    %c0_6 = arith.constant 0 : index
    %c0_7 = arith.constant 0 : index
    %11 = vector.load %arg4[%c0_6, %c0_7] : memref<256x10xf32, #tpu.memory_space<vmem>>, vector<256x10xf32>
    %12 = arith.truncf %11 : vector<256x10xf32> to vector<256x10xbf16>
    %cst_8 = arith.constant dense<0.000000e+00> : vector<8x10xf32>
    %13 = tpu.matmul %10, %12, %cst_8 {dimension_numbers = #tpu.dot_dimension_numbers<[1], [0], [0], [1], [0, 0, 1, 1], [], []>} : vector<8x256xbf16>, vector<256x10xbf16>, vector<8x10xf32> -> vector<8x10xf32>
    %c0_9 = arith.constant 0 : index
    %c0_10 = arith.constant 0 : index
    %14 = vector.load %arg5[%c0_9, %c0_10] : memref<1x10xf32, #tpu.memory_space<vmem>>, vector<1x10xf32>
    %15 = vector.broadcast %14 : vector<1x10xf32> to vector<8x10xf32>
    %16 = arith.addf %13, %15 : vector<8x10xf32>
    %c0_11 = arith.constant 0 : index
    %c0_12 = arith.constant 0 : index
    %17 = vector.load %arg6[%c0_11, %c0_12] : memref<8x10xf32, #tpu.memory_space<vmem>>, vector<8x10xf32>
    tpu.vector_store %arg6[%c0_11, %c0_12], %16 {strides = array<i32>} : memref<8x10xf32, #tpu.memory_space<vmem>>, vector<8x10xf32>,
    return
  }
  func.func @transform_0(%arg0: i32) -> (i32, i32) {
    %c0_i32 = arith.constant 0 : i32
    %c0_i32_0 = arith.constant 0 : i32
    return %arg0, %c0_i32 : i32, i32
  }
  func.func @transform_1(%arg0: i32) -> (i32, i32) {
    %c0_i32 = arith.constant 0 : i32
    %c0_i32_0 = arith.constant 0 : i32
    %c0_i32_1 = arith.constant 0 : i32
    return %c0_i32, %c0_i32_0 : i32, i32
  }
  func.func @transform_2(%arg0: i32) -> (i32, i32) {
    %c0_i32 = arith.constant 0 : i32
    %c0_i32_0 = arith.constant 0 : i32
    %c0_i32_1 = arith.constant 0 : i32
    return %c0_i32, %c0_i32_0 : i32, i32
  }
  func.func @transform_3(%arg0: i32) -> (i32, i32) {
    %c0_i32 = arith.constant 0 : i32
    %c0_i32_0 = arith.constant 0 : i32
    %c0_i32_1 = arith.constant 0 : i32
    return %c0_i32, %c0_i32_0 : i32, i32
  }
  func.func @transform_4(%arg0: i32) -> (i32, i32) {
    %c0_i32 = arith.constant 0 : i32
    %c0_i32_0 = arith.constant 0 : i32
    %c0_i32_1 = arith.constant 0 : i32
    return %c0_i32, %c0_i32_0 : i32, i32
  }
  func.func @transform_5(%arg0: i32) -> (i32, i32) {
    %c0_i32 = arith.constant 0 : i32
    %c0_i32_0 = arith.constant 0 : i32
    return %arg0, %c0_i32 : i32, i32
  }
}

</mosaic_0001>

<llo_original>
// kernel: tpu_custom_call.1
$region0: #{tpu_custom_call.1}
  #allocation0 [shape = 'u32[]', space=smem, size = 0x4, offset = 0x4, fixed_abs, tag = 'smem constant byte address 0x4 - core index']
  #allocation1 [shape = 'u32[144,128]{1,0:T(1,128)}', space=vmem, size = 0x12000, scoped, tag = 'internal scratch']
  %s0 = inlined_call_operand.vmem [shape: f32[8,20], index: 0, kind: input, shape index: {}]
  %s1 = inlined_call_operand.vmem [shape: f32[20,256], index: 1, kind: input, shape index: {}]
  %s2 = inlined_call_operand.vmem [shape: f32[1,256], index: 2, kind: input, shape index: {}]
  %s3 = inlined_call_operand.vmem [shape: f32[256,10], index: 3, kind: input, shape index: {}]
  %s4 = inlined_call_operand.vmem [shape: f32[1,10], index: 4, kind: input, shape index: {}]
  %s5 = inlined_call_operand.hbm [shape: f32[8,10], index: 5, kind: output, shape index: {}]
  %s6 = sld [smem:[#allocation0]]
  $region30: #{tpu_custom_call.1} parent=0
    _
  %s8 = ssub.s32 1, %s6
  %s9 = scalar_select 0, %s8, %s6
  $region1: #{tpu_custom_call.1} parent=0
    #allocation2 [shape = 'u8[4096]{0}', space=vmem, size = 0x1000, scoped, tag = 'output window, operand 0, single buffered']
    #allocation3 [shape = 's32[1]{0}', space=sflag, size = 0x4, scoped, tag = 'scoped memory for tpu_custom_call.1']
    %10 = vsyncpa [#allocation3], 0
    // Predicated region
    $region2: #{tpu_custom_call.1} parent=1 // pred_check
      _
    $region3: #{tpu_custom_call.1} parent=1 // pred_check_branch
      %12 = sbr.rel (0) target = $region5
    $region4: #{tpu_custom_call.1} parent=1 // pred_region
      _
    $region5: #{tpu_custom_call.1} parent=1 // pred_fallthru
      _
    // Predicated region
    $region6: #{tpu_custom_call.1} parent=1 // pred_check
      _
    $region7: #{tpu_custom_call.1} parent=1 // pred_check_branch
      %14 = sbr.rel (0) target = $region9
    $region8: #{tpu_custom_call.1} parent=1 // pred_region
      _
    $region9: #{tpu_custom_call.1} parent=1 // pred_fallthru
      _
    // Predicated region
    $region10: #{tpu_custom_call.1} parent=1 // pred_check
      _
    $region11: #{tpu_custom_call.1} parent=1 // pred_check_branch
      %16 = sbr.rel (0) target = $region13
    $region12: #{tpu_custom_call.1} parent=1 // pred_region
      _
    $region13: #{tpu_custom_call.1} parent=1 // pred_fallthru
      _
    // Predicated region
    $region14: #{tpu_custom_call.1} parent=1 // pred_check
      _
    $region15: #{tpu_custom_call.1} parent=1 // pred_check_branch
      %18 = sbr.rel (0) target = $region17
    $region16: #{tpu_custom_call.1} parent=1 // pred_region
      _
    $region17: #{tpu_custom_call.1} parent=1 // pred_fallthru
      _
    // Predicated region
    $region18: #{tpu_custom_call.1} parent=1 // pred_check
      _
    $region19: #{tpu_custom_call.1} parent=1 // pred_check_branch
      %20 = sbr.rel (0) target = $region21
    $region20: #{tpu_custom_call.1} parent=1 // pred_region
      _
    $region21: #{tpu_custom_call.1} parent=1 // pred_fallthru
      _
    %v22 = vld [vmem:[%s0] sm:$0xff]
    %v23 = vpack.c.bf16 %v22, %v22
    %v24 = vld [vmem:[%s1] sm:$0xff]
    %v25 = vld [vmem:[%s1 + $0x8] sm:$0xff]
    %v26 = vld [vmem:[%s1 + $0x10] sm:$0xff]
    %v27 = vld [vmem:[%s1 + $0x18] sm:$0xff]
    %v28 = vld [vmem:[%s1 + $0x20] sm:$0xf]
    %v29 = vld [vmem:[%s1 + $0x28] sm:$0xf]
    %v30 = vpack.c.bf16 %v26, %v24
    %v31 = vpack.c.bf16 %v27, %v25
    %v32 = vpack.c.bf16 %v28, %v28
    %v33 = vpack.c.bf16 %v29, %v29
    %v34 = vld [vmem:[%s2] sm:$0x3]
    %v36 = vlaneseq
    %v37 = vshrl.u32 %v36, 7
    %v38 = vsub.s32 0, %v37
    %v39 = vrot.slane %v34, %v38
    %v40 = vlaneseq
    %v41 = vshrl.u32 %v40, 7
    %v42 = vsub.s32 1, %v41
    %v43 = vrot.slane %v34, %v42
    %vm46 = vcmask 162816
    %v48 = vsel %vm46, %v23, 0
    %vm50 = vcmask 1041408
    %v52 = vsel %vm50, %v32, 0
    %v55 = vsel %vm50, %v33, 0
    %57 = vmatprep.subr.bf16.mxu0 %v31
    %58 = vmatpush1.bf16.msra.mxu0 %v30
    %59 = vmatprep.subr.bf16.mxu0 %v55
    %60 = vmatpush1.bf16.msra.mxu0 %v52
    %61 = vmatprep.subr.bf16.mxu0 0
    %62 = vmatpush1.bf16.msra.mxu0 0
    %63 = vmatprep.subr.bf16.mxu0 0
    %64 = vmatpush1.bf16.msra.mxu0 0
    %65 = vmatprep.subr.bf16.mxu0 0
    %66 = vmatpush1.bf16.msra.mxu0 0
    %67 = vmatprep.subr.bf16.mxu0 0
    %68 = vmatpush1.bf16.msra.mxu0 0
    %69 = vmatprep.subr.bf16.mxu0 0
    %70 = vmatpush1.bf16.msra.mxu0 0
    %71 = vmatprep.subr.bf16.mxu0 0
    %72 = vmatpush1.bf16.msra.mxu0 0
    %73 = vmatprep.subr.bf16.mxu0 0
    %74 = vmatpush1.bf16.msra.mxu0 0
    %75 = vmatprep.subr.bf16.mxu0 0
    %76 = vmatpush1.bf16.msra.mxu0 0
    %77 = vmatprep.subr.bf16.mxu0 0
    %78 = vmatpush1.bf16.msra.mxu0 0
    %79 = vmatprep.subr.bf16.mxu0 0
    %80 = vmatpush1.bf16.msra.mxu0 0
    %81 = vmatprep.subr.bf16.mxu0 0
    %82 = vmatpush1.bf16.msra.mxu0 0
    %83 = vmatprep.subr.bf16.mxu0 0
    %84 = vmatpush1.bf16.msra.mxu0 0
    %85 = vmatprep.subr.bf16.mxu0 0
    %86 = vmatpush1.bf16.msra.mxu0 0
    %87 = vmatprep.subr.bf16.mxu0 0
    %88 = vmatpush1.bf16.msra.mxu0 0
    %89 = vmatprep.mubr.bf16.mxu0 0
    %90 = vmatmul.mubr.bf16.gmra.mrb[0].mxu0 %v48
    %v91 = vpop.f32.mrb[0].mxu0
    %v92 = vadd.f32 %v39, %v91
    %v93 = vpop.f32.mrb[0].mxu0
    %v94 = vadd.f32 %v43, %v93
    %v95 = vpop.f32.mrb[0].mxu0
    %v96 = vpop.f32.mrb[0].mxu0
    %97 = vdwg.mxu0
    %v98 = vmax.f32 %v92, 0.0
    %v99 = vmax.f32 %v94, 0.0
    %v100 = vpack.c.bf16 %v98, %v98
    %v101 = vpack.c.bf16 %v99, %v99
    %v102 = vld [vmem:[%s3] sm:$0xff]
    %v103 = vld [vmem:[%s3 + $0x8] sm:$0xff]
    %v104 = vld [vmem:[%s3 + $0x10] sm:$0xff]
    %v105 = vld [vmem:[%s3 + $0x18] sm:$0xff]
    %v106 = vld [vmem:[%s3 + $0x20] sm:$0xff]
    %v107 = vld [vmem:[%s3 + $0x28] sm:$0xff]
    %v108 = vld [vmem:[%s3 + $0x30] sm:$0xff]
    %v109 = vld [vmem:[%s3 + $0x38] sm:$0xff]
    %v110 = vld [vmem:[%s3 + $0x40] sm:$0xff]
    %v111 = vld [vmem:[%s3 + $0x48] sm:$0xff]
    %v112 = vld [vmem:[%s3 + $0x50] sm:$0xff]
    %v113 = vld [vmem:[%s3 + $0x58] sm:$0xff]
    %v114 = vld [vmem:[%s3 + $0x60] sm:$0xff]
    %v115 = vld [vmem:[%s3 + $0x68] sm:$0xff]
    %v116 = vld [vmem:[%s3 + $0x70] sm:$0xff]
    %v117 = vld [vmem:[%s3 + $0x78] sm:$0xff]
    %v118 = vld [vmem:[%s3 + $0x80] sm:$0xff]
    %v119 = vld [vmem:[%s3 + $0x88] sm:$0xff]
    %v120 = vld [vmem:[%s3 + $0x90] sm:$0xff]
    %v121 = vld [vmem:[%s3 + $0x98] sm:$0xff]
    %v122 = vld [vmem:[%s3 + $0xa0] sm:$0xff]
    %v123 = vld [vmem:[%s3 + $0xa8] sm:$0xff]
    %v124 = vld [vmem:[%s3 + $0xb0] sm:$0xff]
    %v125 = vld [vmem:[%s3 + $0xb8] sm:$0xff]
    %v126 = vld [vmem:[%s3 + $0xc0] sm:$0xff]
    %v127 = vld [vmem:[%s3 + $0xc8] sm:$0xff]
    %v128 = vld [vmem:[%s3 + $0xd0] sm:$0xff]
    %v129 = vld [vmem:[%s3 + $0xd8] sm:$0xff]
    %v130 = vld [vmem:[%s3 + $0xe0] sm:$0xff]
    %v131 = vld [vmem:[%s3 + $0xe8] sm:$0xff]
    %v132 = vld [vmem:[%s3 + $0xf0] sm:$0xff]
    %v133 = vld [vmem:[%s3 + $0xf8] sm:$0xff]
    %v134 = vpack.c.bf16 %v103, %v102
    %v135 = vpack.c.bf16 %v105, %v104
    %v136 = vpack.c.bf16 %v107, %v106
    %v137 = vpack.c.bf16 %v109, %v108
    %v138 = vpack.c.bf16 %v111, %v110
    %v139 = vpack.c.bf16 %v113, %v112
    %v140 = vpack.c.bf16 %v115, %v114
    %v141 = vpack.c.bf16 %v117, %v116
    %v142 = vpack.c.bf16 %v119, %v118
    %v143 = vpack.c.bf16 %v121, %v120
    %v144 = vpack.c.bf16 %v123, %v122
    %v145 = vpack.c.bf16 %v125, %v124
    %v146 = vpack.c.bf16 %v127, %v126
    %v147 = vpack.c.bf16 %v129, %v128
    %v148 = vpack.c.bf16 %v131, %v130
    %v149 = vpack.c.bf16 %v133, %v132
    %v150 = vld [vmem:[%s4] sm:$0x1]
    %v152 = vlaneseq
    %v153 = vshrl.u32 %v152, 7
    %v154 = vsub.s32 0, %v153
    %v155 = vrot.slane %v150, %v154
    %157 = vmatprep.subr.bf16.mxu0 0
    %158 = vmatpush1.bf16.msra.mxu0 %v134
    %159 = vmatprep.subr.bf16.mxu0 0
    %160 = vmatpush1.bf16.msra.mxu0 %v135
    %161 = vmatprep.subr.bf16.mxu0 0
    %162 = vmatpush1.bf16.msra.mxu0 %v136
    %163 = vmatprep.subr.bf16.mxu0 0
    %164 = vmatpush1.bf16.msra.mxu0 %v137
    %165 = vmatprep.subr.bf16.mxu0 0
    %166 = vmatpush1.bf16.msra.mxu0 %v138
    %167 = vmatprep.subr.bf16.mxu0 0
    %168 = vmatpush1.bf16.msra.mxu0 %v139
    %169 = vmatprep.subr.bf16.mxu0 0
    %170 = vmatpush1.bf16.msra.mxu0 %v140
    %171 = vmatprep.subr.bf16.mxu0 0
    %172 = vmatpush1.bf16.msra.mxu0 %v141
    %173 = vmatprep.subr.bf16.mxu0 0
    %174 = vmatpush1.bf16.msra.mxu0 %v142
    %175 = vmatprep.subr.bf16.mxu0 0
    %176 = vmatpush1.bf16.msra.mxu0 %v143
    %177 = vmatprep.subr.bf16.mxu0 0
    %178 = vmatpush1.bf16.msra.mxu0 %v144
    %179 = vmatprep.subr.bf16.mxu0 0
    %180 = vmatpush1.bf16.msra.mxu0 %v145
    %181 = vmatprep.subr.bf16.mxu0 0
    %182 = vmatpush1.bf16.msra.mxu0 %v146
    %183 = vmatprep.subr.bf16.mxu0 0
    %184 = vmatpush1.bf16.msra.mxu0 %v147
    %185 = vmatprep.subr.bf16.mxu0 0
    %186 = vmatpush1.bf16.msra.mxu0 %v148
    %187 = vmatprep.subr.bf16.mxu0 0
    %188 = vmatpush1.bf16.msra.mxu0 %v149
    %189 = vmatprep.mubr.bf16.mxu0 %v101
    %190 = vmatmul.mubr.bf16.gmra.mrb[0].mxu0 %v100
    %v191 = vpop.f32.mrb[0].mxu0
    %v192 = vadd.f32 %v155, %v191
    %v193 = vpop.f32.mrb[0].mxu0
    %v194 = vpop.f32.mrb[0].mxu0
    %v195 = vpop.f32.mrb[0].mxu0
    %196 = vdwg.mxu0
    %vm197 = vcmask 80896
    %198 = vst.msk [vmem:[#allocation2] sm:$0xff] %vm197, %v192
    // Predicated region
    $region22: #{tpu_custom_call.1} parent=1 // pred_check
      _
    $region23: #{tpu_custom_call.1} parent=1 // pred_check_branch
      %200 = sbr.rel (0) target = $region25
    $region24: #{tpu_custom_call.1} parent=1 // pred_region
      %s202 = ssub.s32 128, 128
      %203 = vsyncadd [#allocation3], %s202
      %s205 = sshll.u32 [#allocation2], 4
      %s206 = int_to_ptr.vmem [resolvable:$true] %s205
      %208 = dma.vmem_to_hbm [thread:$0]  %s206, 128, %s5, [#allocation3]
    $region25: #{tpu_custom_call.1} parent=1 // pred_fallthru
      _
    // Predicated region
    $region26: #{tpu_custom_call.1} parent=1 // pred_check
      _
    $region27: #{tpu_custom_call.1} parent=1 // pred_check_branch
      %210 = sbr.rel (0) target = $region29
    $region28: #{tpu_custom_call.1} parent=1 // pred_region
      %211 = dma.done [#allocation3], 128
    $region29: #{tpu_custom_call.1} parent=1 // pred_fallthru
      _
    %212 = vsyncpa [#allocation3], 1

</llo_original>
